<compile_context>
chip_gen: v5e
topology: v5e:2x2
jax: 0.10.0
libtpu: 0.0.40
codegen_flags: <defaults>
</compile_context>

<pallas_src>
import functools

import numpy as np
import jax
import jax.numpy as jnp
from jax import lax
from jax.experimental import pallas as pl
from jax.experimental.pallas import tpu as pltpu


def _round_up(v, m):
    return (v + m - 1) // m * m


# -----------------------------------------------------------------------------
# Pallas kernels
# -----------------------------------------------------------------------------
def _conv3x3_bn_relu_kernel(x_ref, w_ref, scale_ref, bias_ref, o_ref, acc_ref,
                            *, H, W, HC):
    """One (batch n, Cout-tile j, Cin-chunk k) step of a direct 3x3 conv.

    x_ref:     (H+2, W+2, tk)  bf16  spatially padded activation, Cin chunk k
    w_ref:     (9, tk, tn)     bf16  3x3 taps, Cin chunk k, Cout tile j
    scale/bias:(1, tn)         f32   folded-BN affine for Cout tile j
    o_ref:     (H*W, tn)       f32   output tile (written at the last k step)
    acc_ref:   (H*W, tn)       f32   VMEM accumulator, persistent across k
    """
    k = pl.program_id(2)

    @pl.when(k == 0)
    def _():
        acc_ref[...] = jnp.zeros_like(acc_ref)

    tk = x_ref.shape[-1]
    # Process output rows in chunks of HC rows to bound live vector sizes.
    for h0 in range(0, H, HC):
        partial = None
        for dy in range(3):
            for dx in range(3):
                xv = x_ref[h0 + dy:h0 + dy + HC, dx:dx + W, :].reshape(HC * W, tk)
                c = jnp.dot(xv, w_ref[dy * 3 + dx],
                            preferred_element_type=jnp.float32)
                partial = c if partial is None else partial + c
        acc_ref[h0 * W:(h0 + HC) * W, :] += partial

    @pl.when(k == pl.num_programs(2) - 1)
    def _():
        for h0 in range(0, H, HC):
            sl = slice(h0 * W, (h0 + HC) * W)
            y = acc_ref[sl, :] * scale_ref[...] + bias_ref[...]
            o_ref[sl, :] = jnp.maximum(y, 0.0).astype(o_ref.dtype)


def _maxpool2x2_kernel(x_ref, v_ref, i_ref, *, C, W):
    """2x2 / stride-2 max pool with PyTorch-style flat argmax indices.

    x_ref: (2, W2, 2*C) : two input rows (2*h2, 2*h2+1); columns pair-folded
           into the lane axis, so the four window candidates are contiguous
           static slices.
    v_ref/i_ref: (W2, C) pooled values / flat (h*W + w) int32 indices.
    """
    a = x_ref[0, :, :C]      # even row, even col
    b = x_ref[0, :, C:]      # even row, odd  col
    c = x_ref[1, :, :C]      # odd  row, even col
    d = x_ref[1, :, C:]      # odd  row, odd  col

    m_ab = jnp.maximum(a, b)
    m_cd = jnp.maximum(c, d)
    off_ab = jnp.where(a >= b, 0, 1)          # first-max tie-break (PyTorch)
    off_cd = jnp.where(c >= d, W, W + 1)
    m = jnp.maximum(m_ab, m_cd)
    off = jnp.where(m_ab >= m_cd, off_ab, off_cd)

    w2 = lax.broadcasted_iota(jnp.int32, a.shape, 0)     # output column index
    base = 2 * W * pl.program_id(1) + 2 * w2             # window origin

    v_ref[...] = m
    i_ref[...] = (base + off).astype(jnp.int32)


def _se_gate_kernel(x_ref, z_ref, w1_ref, b1_ref, w2_ref, b2_ref, o_ref):
    """Se_module_diff(x, z) for one batch element (Avg_size == 1)."""
    hx, wx, _ = x_ref.shape
    s = jnp.sum(x_ref[...], axis=0)                  # (Wx, Cin)
    s = jnp.sum(s, axis=0, keepdims=True)            # (1, Cin)
    avg = s * (1.0 / float(hx * wx))                 # adaptive avg-pool to 1x1

    y = jnp.dot(avg, w1_ref[...], preferred_element_type=jnp.float32) + b1_ref[...]
    y = y * (1.0 / (1.0 + jnp.exp(-y)))              # y * sigmoid(y)
    y = jnp.dot(y, w2_ref[...], preferred_element_type=jnp.float32) + b2_ref[...]
    g = 1.0 / (1.0 + jnp.exp(-y))                    # (1, Cout) sigmoid gate

    o_ref[...] = z_ref[...] * g.reshape(1, 1, g.shape[-1])


# -----------------------------------------------------------------------------
# Pallas wrappers (glue: pad / reshape / transpose only)
# -----------------------------------------------------------------------------
def conv3x3_bn_relu(x_nhwc, p):
    """3x3 conv (stride 1, pad 1) + folded BN + ReLU using packed params."""
    N, H, W, cin = x_nhwc.shape
    wp, scale, bias = p["wp"], p["scale"], p["bias"]
    _, cinp, coutp = wp.shape
    cout = p["cout"]
    assert p["cin"] == cin

    # Channel-pad to the packed Cin, add the 3x3 spatial halo, cast to bf16.
    x16 = x_nhwc.astype(jnp.bfloat16)
    xp = jnp.pad(x16, ((0, 0), (1, 1), (1, 1), (0, cinp - cin)))
    Hp, Wp = H + 2, W + 2
    HW = H * W

    tk = cinp if cinp <= 256 else 256
    tn = 256 if coutp % 256 == 0 else 128
    tn = min(tn, coutp)
    assert cinp % tk == 0 and coutp % tn == 0
    n_k = cinp // tk
    n_j = coutp // tn

    # Chunk output rows so per-chunk vectors stay at a few hundred KB.
    hc = H
    while hc * W > 512 and hc % 2 == 0:
        hc //= 2

    kernel = functools.partial(_conv3x3_bn_relu_kernel, H=H, W=W, HC=hc)
    cost = pl.CostEstimate(
        flops=2 * N * HW * 9 * cinp * coutp,
        transcendentals=0,
        bytes_accessed=int(xp.size) * 2 + int(wp.size) * 2
        + N * HW * coutp * 4 + 2 * coutp * 4)

    out = pl.pallas_call(
        kernel,
        out_shape=jax.ShapeDtypeStruct((N, HW, coutp), jnp.float32),
        grid=(N, n_j, n_k),
        in_specs=[
            pl.BlockSpec((None, Hp, Wp, tk), lambda n, j, k: (n, 0, 0, k)),
            pl.BlockSpec((9, tk, tn), lambda n, j, k: (0, k, j)),
            pl.BlockSpec((1, tn), lambda n, j, k: (0, j)),
            pl.BlockSpec((1, tn), lambda n, j, k: (0, j)),
        ],
        out_specs=pl.BlockSpec((None, HW, tn), lambda n, j, k: (n, 0, j)),
        scratch_shapes=[pltpu.VMEM((HW, tn), jnp.float32)],
        compiler_params=pltpu.CompilerParams(
            dimension_semantics=("parallel", "parallel", "arbitrary")),
        cost_estimate=cost,
    )(xp, wp, scale, bias)

    out = out.reshape(N, H, W, coutp)
    if cout != coutp:
        out = out[..., :cout]        # drop lane padding (enco1 only)
    return out


def maxpool2x2(x_nhwc):
    """2x2 stride-2 max pool; returns (values NHWC, flat indices NHWC int32)."""
    N, H, W, C = x_nhwc.shape
    H2, W2 = H // 2, W // 2
    # Free (bitcast) regrouping: (N,H,W,C) -> (N,H2,2,W2,2C).
    xr = x_nhwc.reshape(N, H2, 2, W2, 2 * C)

    kernel = functools.partial(_maxpool2x2_kernel, C=C, W=W)
    in_spec = pl.BlockSpec((None, None, 2, W2, 2 * C),
                           lambda n, h: (n, h, 0, 0, 0))
    out_spec = pl.BlockSpec((None, None, W2, C), lambda n, h: (n, h, 0, 0))

    vals, idx = pl.pallas_call(
        kernel,
        out_shape=(jax.ShapeDtypeStruct((N, H2, W2, C), jnp.float32),
                   jax.ShapeDtypeStruct((N, H2, W2, C), jnp.int32)),
        grid=(N, H2),
        in_specs=[in_spec],
        out_specs=(out_spec, out_spec),
        compiler_params=pltpu.CompilerParams(
            dimension_semantics=("parallel", "parallel")),
    )(xr)
    return vals, idx


def se_module(x_nhwc, z_nhwc, p):
    """Se_module_diff(x, z) with Avg_size == 1 (no upsample branch)."""
    w1, b1, w2, b2 = p
    N, Hx, Wx, Cin = x_nhwc.shape
    _, Hz, Wz, Cout = z_nhwc.shape
    Cmid = w1.shape[1]

    out = pl.pallas_call(
        _se_gate_kernel,
        out_shape=jax.ShapeDtypeStruct((N, Hz, Wz, Cout), jnp.float32),
        grid=(N,),
        in_specs=[pl.BlockSpec((None, Hx, Wx, Cin), lambda n: (n, 0, 0, 0)),
                  pl.BlockSpec((None, Hz, Wz, Cout), lambda n: (n, 0, 0, 0)),
                  pl.BlockSpec((Cin, Cmid), lambda n: (0, 0)),
                  pl.BlockSpec((1, Cmid), lambda n: (0, 0)),
                  pl.BlockSpec((Cmid, Cout), lambda n: (0, 0)),
                  pl.BlockSpec((1, Cout), lambda n: (0, 0))],
        out_specs=pl.BlockSpec((None, Hz, Wz, Cout), lambda n: (n, 0, 0, 0)),
        compiler_params=pltpu.CompilerParams(
            dimension_semantics=("parallel",)),
    )(x_nhwc, z_nhwc, w1, b1, w2, b2)
    return out


# -----------------------------------------------------------------------------
# Deterministic parameter construction (synthetic; no checkpoint loading)
# -----------------------------------------------------------------------------
def conv_params(key, cin, cout, eps=1e-5):
    kw, kb, kg, kbt, km, kv = jax.random.split(key, 6)
    w = jax.random.normal(kw, (3, 3, cin, cout), jnp.float32) * np.sqrt(2.0 / (9 * cout))
    conv_b = 0.01 * jax.random.normal(kb, (cout,), jnp.float32)
    gamma = 1.0 + 0.1 * jax.random.normal(kg, (cout,), jnp.float32)
    beta = 0.1 * jax.random.normal(kbt, (cout,), jnp.float32)
    mean = 0.1 * jax.random.normal(km, (cout,), jnp.float32)
    var = 1.0 + 0.1 * jax.random.uniform(kv, (cout,), jnp.float32)
    scale = gamma / jnp.sqrt(var + eps)                 # BN folded (inference)
    bias = beta + (conv_b - mean) * scale

    # Pack & pad once: Cin -> multiple of 8, Cout -> multiple of 128 (lane
    # density), weight laid out as (9 taps, Cinp, Coutp) in bf16 for the MXU.
    cinp = _round_up(cin, 8)
    coutp = _round_up(cout, 128)
    w_pad = jnp.zeros((3, 3, cinp, coutp), jnp.float32).at[:, :, :cin, :cout].set(w)
    wp = w_pad.reshape(9, cinp, coutp).astype(jnp.bfloat16)
    scale_p = jnp.zeros((1, coutp), jnp.float32).at[0, :cout].set(scale)
    bias_p = jnp.zeros((1, coutp), jnp.float32).at[0, :cout].set(bias)
    return {"wp": wp, "scale": scale_p, "bias": bias_p, "cin": cin, "cout": cout}


def se_params(key, inp, oup, se_ratio=4):
    mid = max(1, int(inp / se_ratio))
    k1, k2 = jax.random.split(key)
    # matches Se_module_diff.reset_parameters: normal(0, sqrt(2/(1*1*cout))), bias 0
    w1 = jax.random.normal(k1, (inp, mid), jnp.float32) * np.sqrt(2.0 / mid)
    b1 = jnp.zeros((1, mid), jnp.float32)
    w2 = jax.random.normal(k2, (mid, oup), jnp.float32) * np.sqrt(2.0 / oup)
    b2 = jnp.zeros((1, oup), jnp.float32)
    return (w1, b1, w2, b2)


def build_params(key, input_channels):
    keys = iter(jax.random.split(key, 32))
    stack = lambda specs: [conv_params(next(keys), ci, co) for ci, co in specs]
    return {
        "enco1": stack([(input_channels, 64), (64, 64)]),
        "enco2": stack([(64, 128), (128, 128)]),
        "enco3": stack([(128, 256), (256, 256), (256, 256)]),
        "enco4": stack([(256, 512), (512, 512), (512, 512)]),
        "enco5": stack([(512, 512), (512, 512), (512, 512)]),
        "sse2": se_params(next(keys), 64, 128),
        "sse3": se_params(next(keys), 128, 256),
        "sse4": se_params(next(keys), 256, 512),
        "sse5": se_params(next(keys), 512, 512),
    }


# -----------------------------------------------------------------------------
# Encoder forward (mirrors the PyTorch Encoder.forward control flow)
# -----------------------------------------------------------------------------
def encoder_forward(x_nchw, params, *, conv_fn, pool_fn, se_fn):
    x = jnp.transpose(x_nchw, (0, 2, 3, 1))          # NCHW -> NHWC

    def block(h, plist):
        for p in plist:
            h = conv_fn(h, p)
        return h

    ids = []
    x1 = block(x, params["enco1"])
    x1, i1 = pool_fn(x1); ids.append(i1)
    x2 = block(x1, params["enco2"])
    x2, i2 = pool_fn(x2); ids.append(i2)
    sse2 = se_fn(x1, x2, params["sse2"])
    x3 = block(sse2, params["enco3"])
    x3, i3 = pool_fn(x3); ids.append(i3)
    sse3 = se_fn(sse2, x3, params["sse3"])
    x4 = block(sse3, params["enco4"])
    x4, i4 = pool_fn(x4); ids.append(i4)
    sse4 = se_fn(sse3, x4, params["sse4"])
    x5 = block(sse4, params["enco5"])
    x5, i5 = pool_fn(x5); ids.append(i5)
    sse5 = se_fn(sse4, x5, params["sse5"])

    sse5_nchw = jnp.transpose(sse5, (0, 3, 1, 2))    # NHWC -> NCHW
    ids_nchw = [jnp.transpose(i, (0, 3, 1, 2)) for i in ids]
    return sse5_nchw, ids_nchw


# -----------------------------------------------------------------------------
# Pure-JAX references for numerical cross-checks
# -----------------------------------------------------------------------------
def ref_conv3x3_bn_relu(x_nhwc, p):
    cin, cout = p["cin"], p["cout"]
    cinp = p["wp"].shape[1]
    w = p["wp"].reshape(3, 3, cinp, -1)[:, :, :cin, :cout]   # same bf16 weights
    y = lax.conv_general_dilated(
        x_nhwc.astype(jnp.bfloat16), w, (1, 1), "SAME",
        dimension_numbers=("NHWC", "HWIO", "NHWC"),
        preferred_element_type=jnp.float32)
    scale = p["scale"][:, :cout].reshape(1, 1, 1, cout)
    bias = p["bias"][:, :cout].reshape(1, 1, 1, cout)
    return jnp.maximum(y * scale + bias, 0.0)


def ref_maxpool2x2(x):
    """Values + PyTorch-style flat argmax indices (first-max tie-break)."""
    N, H, W, C = x.shape
    a = x[:, 0::2, 0::2, :]; b = x[:, 0::2, 1::2, :]
    c = x[:, 1::2, 0::2, :]; d = x[:, 1::2, 1::2, :]
    stacked = jnp.stack([a, b, c, d], axis=0)
    m = jnp.max(stacked, axis=0)
    sel = jnp.argmax(stacked, axis=0)                # first max = window order
    offs = jnp.array([0, 1, W, W + 1], jnp.int32)[sel]
    h2 = jnp.arange(H // 2, dtype=jnp.int32)[None, :, None, None]
    w2 = jnp.arange(W // 2, dtype=jnp.int32)[None, None, :, None]
    base = 2 * h2 * W + 2 * w2
    return m, (base + offs).astype(jnp.int32)


def ref_se(x, z, p):
    w1, b1, w2, b2 = p
    avg = jnp.mean(x, axis=(1, 2))                   # (N, Cin)
    y = avg @ w1 + b1
    y = y * jax.nn.sigmoid(y)
    y = y @ w2 + b2
    g = jax.nn.sigmoid(y)
    return z * g[:, None, None, :]


# -----------------------------------------------------------------------------
if __name__ == "__main__":
    key = jax.random.PRNGKey(0)
    kx, kp, kt = jax.random.split(key, 3)

    # Small shapes: batch=2, input_channels=4, spatial=32 (needs 5 pool levels).
    N, Cin, H, W = 2, 4, 32, 32
    x = jax.random.normal(kx, (N, Cin, H, W), jnp.float32)
    params = build_params(kp, Cin)

    # --- unit test of the pool kernel: values AND PyTorch-style indices ------
    t = jax.random.normal(kt, (2, 8, 8, 64), jnp.float32)
    pv, pi = maxpool2x2(t)
    rv, ri = ref_maxpool2x2(t)
    pv, pi = jax.block_until_ready(pv), jax.block_until_ready(pi)
    np.testing.assert_array_equal(np.asarray(pv), np.asarray(rv))
    np.testing.assert_array_equal(np.asarray(pi), np.asarray(ri))

    # --- full encoder forward with Pallas kernels ----------------------------
    sse5, ids = encoder_forward(
        x, params, conv_fn=conv3x3_bn_relu, pool_fn=maxpool2x2, se_fn=se_module)
    sse5 = jax.block_until_ready(sse5)
    ids = [jax.block_until_ready(i) for i in ids]

    # Shape checks (match PyTorch Encoder outputs at this input size).
    assert sse5.shape == (N, 512, 1, 1), sse5.shape
    expected_id_shapes = [(N, 64, 16, 16), (N, 128, 8, 8), (N, 256, 4, 4),
                          (N, 512, 2, 2), (N, 512, 1, 1)]
    assert [tuple(i.shape) for i in ids] == expected_id_shapes
    assert all(i.dtype == jnp.int32 for i in ids)
    # Flat indices must lie inside each level's pre-pool (H*W) plane.
    for i, side in zip(ids, (32, 16, 8, 4, 2)):
        iv = np.asarray(i)
        assert iv.min() >= 0 and iv.max() < side * side

    # Numerical cross-check of the value path against a pure-JAX reference
    # that uses the same bf16 inputs / f32 accumulation discipline.
    ref_sse5, _ = encoder_forward(
        x, params, conv_fn=ref_conv3x3_bn_relu, pool_fn=ref_maxpool2x2,
        se_fn=ref_se)
    ref_sse5 = jax.block_until_ready(ref_sse5)
    np.testing.assert_allclose(np.asarray(sse5), np.asarray(ref_sse5),
                               rtol=1e-2, atol=1e-2)

    print("KERNEL_OK")
</pallas_src>

<mosaic_0001>
module attributes {stable_mosaic.version = 11 : i64} {
  func.func @_maxpool2x2_kernel(%arg0: i32, %arg1: i32, %arg2: memref<1x1x2x4x128xf32, #tpu.memory_space<vmem>>, %arg3: memref<1x1x4x64xf32, #tpu.memory_space<vmem>>, %arg4: memref<1x1x4x64xi32, #tpu.memory_space<vmem>>) attributes {dimension_semantics = [#tpu.dimension_semantics<parallel>, #tpu.dimension_semantics<parallel>], iteration_bounds = array<i64: 2, 4>, scalar_prefetch = 0 : i64, scratch_operands = 0 : i64, tpu.core_type = #tpu.core_type<tc>, window_params = [{transform_indices = @transform_0, window_bounds = array<i64: 1, 1, 2, 4, 128>}, {transform_indices = @transform_1, window_bounds = array<i64: 1, 1, 4, 64>}, {transform_indices = @transform_2, window_bounds = array<i64: 1, 1, 4, 64>}]} {
    %c0 = arith.constant 0 : index
    %c0_0 = arith.constant 0 : index
    %c0_1 = arith.constant 0 : index
    %c0_2 = arith.constant 0 : index
    %c0_3 = arith.constant 0 : index
    %0 = vector.load %arg2[%c0, %c0_0, %c0_1, %c0_2, %c0_3] : memref<1x1x2x4x128xf32, #tpu.memory_space<vmem>>, vector<1x1x1x4x64xf32>
    %1 = vector.shape_cast %0 : vector<1x1x1x4x64xf32> to vector<4x64xf32>
    %c0_4 = arith.constant 0 : index
    %c0_5 = arith.constant 0 : index
    %c0_6 = arith.constant 0 : index
    %c0_7 = arith.constant 0 : index
    %c64 = arith.constant 64 : index
    %2 = vector.load %arg2[%c0_4, %c0_5, %c0_6, %c0_7, %c64] : memref<1x1x2x4x128xf32, #tpu.memory_space<vmem>>, vector<1x1x1x4x64xf32>
    %3 = vector.shape_cast %2 : vector<1x1x1x4x64xf32> to vector<4x64xf32>
    %c0_8 = arith.constant 0 : index
    %c0_9 = arith.constant 0 : index
    %c1 = arith.constant 1 : index
    %c0_10 = arith.constant 0 : index
    %c0_11 = arith.constant 0 : index
    %4 = vector.load %arg2[%c0_8, %c0_9, %c1, %c0_10, %c0_11] : memref<1x1x2x4x128xf32, #tpu.memory_space<vmem>>, vector<1x1x1x4x64xf32>
    %5 = vector.shape_cast %4 : vector<1x1x1x4x64xf32> to vector<4x64xf32>
    %c0_12 = arith.constant 0 : index
    %c0_13 = arith.constant 0 : index
    %c1_14 = arith.constant 1 : index
    %c0_15 = arith.constant 0 : index
    %c64_16 = arith.constant 64 : index
    %6 = vector.load %arg2[%c0_12, %c0_13, %c1_14, %c0_15, %c64_16] : memref<1x1x2x4x128xf32, #tpu.memory_space<vmem>>, vector<1x1x1x4x64xf32>
    %7 = vector.shape_cast %6 : vector<1x1x1x4x64xf32> to vector<4x64xf32>
    %8 = arith.maximumf %1, %3 : vector<4x64xf32>
    %9 = arith.maximumf %5, %7 : vector<4x64xf32>
    %10 = arith.cmpf oge, %1, %3 : vector<4x64xf32>
    %c0_i32 = arith.constant 0 : i32
    %c1_i32 = arith.constant 1 : i32
    %11 = vector.broadcast %c0_i32 : i32 to vector<4x64xi32>
    %12 = vector.broadcast %c1_i32 : i32 to vector<4x64xi32>
    %13 = arith.select %10, %11, %12 : vector<4x64xi1>, vector<4x64xi32>
    %14 = arith.cmpf oge, %5, %7 : vector<4x64xf32>
    %c8_i32 = arith.constant 8 : i32
    %c9_i32 = arith.constant 9 : i32
    %15 = vector.broadcast %c8_i32 : i32 to vector<4x64xi32>
    %16 = vector.broadcast %c9_i32 : i32 to vector<4x64xi32>
    %17 = arith.select %14, %15, %16 : vector<4x64xi1>, vector<4x64xi32>
    %18 = arith.maximumf %8, %9 : vector<4x64xf32>
    %19 = arith.cmpf oge, %8, %9 : vector<4x64xf32>
    %20 = arith.select %19, %13, %17 : vector<4x64xi1>, vector<4x64xi32>
    %21 = tpu.iota {dimensions = array<i32: 0>} : vector<4x64xi32>
    %c16_i32 = arith.constant 16 : i32
    %22 = arith.muli %c16_i32, %arg1 : i32
    %c2_i32 = arith.constant 2 : i32
    %23 = vector.broadcast %c2_i32 : i32 to vector<4x64xi32>
    %24 = arith.muli %23, %21 : vector<4x64xi32>
    %25 = vector.broadcast %22 : i32 to vector<4x64xi32>
    %26 = arith.addi %25, %24 : vector<4x64xi32>
    %c0_17 = arith.constant 0 : index
    %c0_18 = arith.constant 0 : index
    %c0_19 = arith.constant 0 : index
    %c0_20 = arith.constant 0 : index
    %27 = vector.load %arg3[%c0_17, %c0_18, %c0_19, %c0_20] : memref<1x1x4x64xf32, #tpu.memory_space<vmem>>, vector<1x1x4x64xf32>
    %28 = vector.shape_cast %27 : vector<1x1x4x64xf32> to vector<4x64xf32>
    %29 = vector.shape_cast %18 : vector<4x64xf32> to vector<1x1x4x64xf32>
    tpu.vector_store %arg3[%c0_17, %c0_18, %c0_19, %c0_20], %29 {strides = array<i32>} : memref<1x1x4x64xf32, #tpu.memory_space<vmem>>, vector<1x1x4x64xf32>,
    %30 = arith.addi %26, %20 : vector<4x64xi32>
    %c0_21 = arith.constant 0 : index
    %c0_22 = arith.constant 0 : index
    %c0_23 = arith.constant 0 : index
    %c0_24 = arith.constant 0 : index
    %31 = vector.load %arg4[%c0_21, %c0_22, %c0_23, %c0_24] : memref<1x1x4x64xi32, #tpu.memory_space<vmem>>, vector<1x1x4x64xi32>
    %32 = vector.shape_cast %31 : vector<1x1x4x64xi32> to vector<4x64xi32>
    %33 = vector.shape_cast %30 : vector<4x64xi32> to vector<1x1x4x64xi32>
    tpu.vector_store %arg4[%c0_21, %c0_22, %c0_23, %c0_24], %33 {strides = array<i32>} : memref<1x1x4x64xi32, #tpu.memory_space<vmem>>, vector<1x1x4x64xi32>,
    return
  }
  func.func @transform_0(%arg0: i32, %arg1: i32) -> (i32, i32, i32, i32, i32) {
    %c0_i32 = arith.constant 0 : i32
    %c0_i32_0 = arith.constant 0 : i32
    %c0_i32_1 = arith.constant 0 : i32
    %c0_i32_2 = arith.constant 0 : i32
    return %arg0, %arg1, %c0_i32, %c0_i32_0, %c0_i32_1 : i32, i32, i32, i32, i32
  }
  func.func @transform_1(%arg0: i32, %arg1: i32) -> (i32, i32, i32, i32) {
    %c0_i32 = arith.constant 0 : i32
    %c0_i32_0 = arith.constant 0 : i32
    %c0_i32_1 = arith.constant 0 : i32
    return %arg0, %arg1, %c0_i32, %c0_i32_0 : i32, i32, i32, i32
  }
  func.func @transform_2(%arg0: i32, %arg1: i32) -> (i32, i32, i32, i32) {
    %c0_i32 = arith.constant 0 : i32
    %c0_i32_0 = arith.constant 0 : i32
    %c0_i32_1 = arith.constant 0 : i32
    return %arg0, %arg1, %c0_i32, %c0_i32_0 : i32, i32, i32, i32
  }
}

</mosaic_0001>

<llo_original>
// kernel: tpu_custom_call.1
$region0: #{tpu_custom_call.1}
  #allocation0 [shape = 'u32[]', space=smem, size = 0x4, offset = 0x4, fixed_abs, tag = 'smem constant byte address 0x4 - core index']
  #allocation1 [shape = 'u32[72,128]{1,0:T(1,128)}', space=vmem, size = 0x9000, scoped, tag = 'internal scratch']
  %s0 = inlined_call_operand.hbm [shape: f32[2,4,2,4,128], index: 0, kind: input, shape index: {}]
  %s1 = inlined_call_operand.hbm [shape: f32[2,4,4,64], index: 1, kind: output, shape index: {0}]
  %s2 = inlined_call_operand.hbm [shape: s32[2,4,4,64], index: 2, kind: output, shape index: {1}]
  %3 = xla_tuple %s1, %s2
  %s4 = sld [smem:[#allocation0]]
  $region49: #{tpu_custom_call.1} parent=0
    _
  %s6 = ssub.s32 1, %s4
  %s7 = scalar_select 0, %s6, %s4
  $region1: #{tpu_custom_call.1} parent=0
    #allocation2 [shape = 'u8[8192]{0}', space=vmem, size = 0x2000, scoped, tag = 'input window, operand 0']
    #allocation3 [shape = 's32[2]{0}', space=sflag, size = 0x8, scoped, tag = 'scoped memory for tpu_custom_call.1']
    #allocation4 [shape = 's32[2]{0}', space=sflag, size = 0x8, scoped, tag = 'scoped memory for tpu_custom_call.1']
    #allocation5 [shape = 'u8[4096]{0}', space=vmem, size = 0x1000, scoped, tag = 'output window, operand 0']
    #allocation6 [shape = 'u8[4096]{0}', space=vmem, size = 0x1000, scoped, tag = 'output window, operand 1']
    #allocation7 [shape = 's32[2]{0}', space=sflag, size = 0x8, scoped, tag = 'scoped memory for tpu_custom_call.1']
    %8 = vsyncpa [#allocation3], 0
    %s9 = scalar_lea.sflag [#allocation3], 1
    %10 = vsyncpa %s9, 0
    %11 = vsyncpa [#allocation4], 0
    %s12 = scalar_lea.sflag [#allocation4], 1
    %13 = vsyncpa %s12, 0
    %14 = vsyncpa [#allocation7], 0
    %s15 = scalar_lea.sflag [#allocation7], 1
    %16 = vsyncpa %s15, 0
    loop: start=0, step=1, limit=10
    $region2: #{tpu_custom_call.1} parent=1 // loop_pre_header
      _
    $region3: #{tpu_custom_call.1} parent=1 // loop_header
      %s18 = sphi 0, %s22
      %p19 = scmp.ge.s32.totalorder %s18, 10
      %s25 = sphi 0, %s37
      %s26 = sphi 0, %s33
      %s27 = sphi 0, %s25
      %s28 = sphi 0, %s26
      %s29 = sphi 0, %s27
      %s30 = sphi 0, %s28
      %s42 = sphi 0, %s44
      %s45 = sphi 0, %s42
      %s46 = sphi 0, %s45
      %s62 = sphi 0, %s46
      %s70 = sphi 0, %s72
      %s73 = sphi 0, %s70
      %s74 = sphi 0, %s73
      %s90 = sphi 0, %s74
      %s98 = sphi 0, %s100
      %s101 = sphi 0, %s98
      %s102 = sphi 0, %s101
      %s118 = sphi 0, %s102
    $region4: #{tpu_custom_call.1} parent=1 // loop_header_branch
      %21 = sbr.rel (%p19) target = $region8
    $region5: #{tpu_custom_call.1} parent=1 // loop_body
      %s23 = ssub.s32 %s18, 1
      %s24 = ssub.s32 %s18, 2
      %s31 = sadd.s32 1, %s26
      %p32 = scmp.ge.s32.totalorder %s31, 4
      %s33 = scalar_select %p32, 0, %s31
      %s34 = sadd.s32 1, %s25
      %s35 = scalar_select %p32, %s34, %s25
      %p36 = scmp.ge.s32.totalorder %s35, 2
      %s37 = scalar_select %p36, 0, %s35
      %s38 = ssub.s32 %s25, %s37
      %s39 = ssub.s32 %s26, %s33
      %s40 = sor.u32 %s38, %s39
      %p41 = scmp.eq.s32.totalorder %s40, 0
      %s43 = sadd.s32 %s42, 1
      %s44 = scalar_select %p41, %s42, %s43
      %p47 = pneg %p41
      %p48 = scmp.eq.s32.totalorder %s18, 7
      %p49 = por %p47, %p48
      %p50 = scmp.ne.s32.totalorder %s42, %s45
      %p51 = scmp.eq.s32.totalorder %s18, 0
      %p52 = por %p50, %p51
      %p53 = scmp.ne.s32.totalorder %s42, %s45
      %p54 = scmp.eq.s32.totalorder %s23, 7
      %p55 = por %p53, %p54
      %p56 = scmp.ne.s32.totalorder %s45, %s46
      %p57 = scmp.eq.s32.totalorder %s23, 0
      %p58 = por %p56, %p57
      %p59 = scmp.ne.s32.totalorder %s45, %s46
      %p60 = scmp.eq.s32.totalorder %s24, 7
      %p61 = por %p59, %p60
      %p63 = scmp.ne.s32.totalorder %s46, %s62
      %p64 = scmp.eq.s32.totalorder %s24, 0
      %p65 = por %p63, %p64
      %s66 = ssub.s32 %s25, %s37
      %s67 = ssub.s32 %s26, %s33
      %s68 = sor.u32 %s66, %s67
      %p69 = scmp.eq.s32.totalorder %s68, 0
      %s71 = sadd.s32 %s70, 1
      %s72 = scalar_select %p69, %s70, %s71
      %p75 = pneg %p69
      %p76 = scmp.eq.s32.totalorder %s18, 7
      %p77 = por %p75, %p76
      %p78 = scmp.ne.s32.totalorder %s70, %s73
      %p79 = scmp.eq.s32.totalorder %s18, 0
      %p80 = por %p78, %p79
      %p81 = scmp.ne.s32.totalorder %s70, %s73
      %p82 = scmp.eq.s32.totalorder %s23, 7
      %p83 = por %p81, %p82
      %p84 = scmp.ne.s32.totalorder %s73, %s74
      %p85 = scmp.eq.s32.totalorder %s23, 0
      %p86 = por %p84, %p85
      %p87 = scmp.ne.s32.totalorder %s73, %s74
      %p88 = scmp.eq.s32.totalorder %s24, 7
      %p89 = por %p87, %p88
      %p91 = scmp.ne.s32.totalorder %s74, %s90
      %p92 = scmp.eq.s32.totalorder %s24, 0
      %p93 = por %p91, %p92
      %s94 = ssub.s32 %s25, %s37
      %s95 = ssub.s32 %s26, %s33
      %s96 = sor.u32 %s94, %s95
      %p97 = scmp.eq.s32.totalorder %s96, 0
      %s99 = sadd.s32 %s98, 1
      %s100 = scalar_select %p97, %s98, %s99
      %p103 = pneg %p97
      %p104 = scmp.eq.s32.totalorder %s18, 7
      %p105 = por %p103, %p104
      %p106 = scmp.ne.s32.totalorder %s98, %s101
      %p107 = scmp.eq.s32.totalorder %s18, 0
      %p108 = por %p106, %p107
      %p109 = scmp.ne.s32.totalorder %s98, %s101
      %p110 = scmp.eq.s32.totalorder %s23, 7
      %p111 = por %p109, %p110
      %p112 = scmp.ne.s32.totalorder %s101, %s102
      %p113 = scmp.eq.s32.totalorder %s23, 0
      %p114 = por %p112, %p113
      %p115 = scmp.ne.s32.totalorder %s101, %s102
      %p116 = scmp.eq.s32.totalorder %s24, 7
      %p117 = por %p115, %p116
      %p119 = scmp.ne.s32.totalorder %s102, %s118
      %p120 = scmp.eq.s32.totalorder %s24, 0
      %p121 = por %p119, %p120
      %p122 = scmp.le.s32.totalorder 1, %s18
      %p123 = scmp.lt.s32.totalorder %s18, 9
      %p124 = pnand %p122, %p123
      %p125 = pneg %p124
      // Predicated region
      $region9: #{tpu_custom_call.1} parent=5 // pred_check
        _
      $region10: #{tpu_custom_call.1} parent=5 // pred_check_branch
        %127 = sbr.rel (%p124) target = $region12
      $region11: #{tpu_custom_call.1} parent=5 // pred_region
        %s128 = ssub.s32 %s18, 1
      $region12: #{tpu_custom_call.1} parent=5 // pred_fallthru
        _
      %p129 = scmp.lt.s32.totalorder %s18, 8
      // Predicated region
      $region13: #{tpu_custom_call.1} parent=5 // pred_check
        %p130 = pneg %p129
      $region14: #{tpu_custom_call.1} parent=5 // pred_check_branch
        %132 = sbr.rel (%p130) target = $region16
      $region15: #{tpu_custom_call.1} parent=5 // pred_region
        // Predicated region
        $region17: #{tpu_custom_call.1} parent=15 // pred_check
          %p133 = pneg %p52
        $region18: #{tpu_custom_call.1} parent=15 // pred_check_branch
          %135 = sbr.rel (%p133) target = $region20
        $region19: #{tpu_custom_call.1} parent=15 // pred_region
          %s136 = sand.u32 %s42, 1
          %s137 = scalar_lea.sflag [#allocation3], %s136
          %s138 = sand.u32 %s42, 1
          %s139 = smul.addr %s138, 8
          %s140 = scalar_lea.vmem [#allocation2], %s139
          %142 = vsyncadd %s137, 0
          %s143 = smul.addr %s26, 2
          %s144 = smul.addr %s25, 8
          %s145 = sadd.s32 %s143, %s144
          %s146 = smul.addr %s145, 4
          %s147 = scalar_lea.hbm %s0, %s146
          %s148 = sshll.u32 %s147, 4
          %s149 = int_to_ptr.hbm [resolvable:$true] %s148
          %s150 = sshll.u32 %s140, 4
          %s151 = int_to_ptr.vmem [resolvable:$true] %s150
          %156 = dma.hbm_to_vmem [thread:$0]  %s149, 128, %s151, %s137, 64, 64, 4
        $region20: #{tpu_custom_call.1} parent=15 // pred_fallthru
          _
      $region16: #{tpu_custom_call.1} parent=5 // pred_fallthru
        _
      %p157 = scmp.le.s32.totalorder 1, %s18
      %p158 = scmp.lt.s32.totalorder %s18, 9
      %p159 = pnand %p157, %p158
      %p160 = pneg %p159
      // Predicated region
      $region21: #{tpu_custom_call.1} parent=5 // pred_check
        _
      $region22: #{tpu_custom_call.1} parent=5 // pred_check_branch
        %162 = sbr.rel (%p159) target = $region24
      $region23: #{tpu_custom_call.1} parent=5 // pred_region
        %s163 = ssub.s32 %s18, 1
        %s164 = sand.u32 %s45, 1
        %s165 = scalar_lea.sflag [#allocation3], %s164
        %s166 = sand.u32 %s45, 1
        %s167 = smul.addr %s166, 8
        %s168 = scalar_lea.vmem [#allocation2], %s167
        // Predicated region
        $region25: #{tpu_custom_call.1} parent=23 // pred_check
          %p169 = pneg %p58
        $region26: #{tpu_custom_call.1} parent=23 // pred_check_branch
          %171 = sbr.rel (%p169) target = $region28
        $region27: #{tpu_custom_call.1} parent=23 // pred_region
          %173 = dma.done %s165, 128
        $region28: #{tpu_custom_call.1} parent=23 // pred_fallthru
          _
        %s174 = sand.u32 %s45, 1
        %s175 = scalar_lea.sflag [#allocation3], %s174
        %s176 = sand.u32 %s45, 1
        %s177 = smul.addr %s176, 8
        %s178 = scalar_lea.vmem [#allocation2], %s177
        %p179 = pneg %p58
        %p180 = pneg %p55
        %p181 = pneg %p86
        %p182 = pneg %p83
        %s183 = sand.u32 %s73, 1
        %s184 = scalar_lea.sflag [#allocation4], %s183
        %s185 = sand.u32 %s73, 1
        %s186 = smul.addr %s185, 4
        %s187 = scalar_lea.vmem [#allocation5], %s186
        %p188 = pneg %p114
        %p189 = pneg %p111
        %s190 = sand.u32 %s101, 1
        %s191 = scalar_lea.sflag [#allocation7], %s190
        %s192 = sand.u32 %s101, 1
        %s193 = smul.addr %s192, 4
        %s194 = scalar_lea.vmem [#allocation6], %s193
        %v195 = vld [vmem:[%s168] sm:$0xf]
        %s196 = scalar_lea.vmem %s168, 4 [#allocation2]
        %v197 = vld [vmem:[%s196] sm:$0xf]
        %199 = vrot.lane.b32.xlu0 %v195, 64
        %v200 = vpop.permute.xlu0 %199
        %v202 = vmax.f32 %v195, %v200
        %204 = vrot.lane.b32.xlu0 %v197, 64
        %v205 = vpop.permute.xlu0 %204
        %v207 = vmax.f32 %v197, %v205
        %vm208 = vcmp.ge.f32.partialorder %v195, %v200
        %v209 = vsel %vm208, 0, 1
        %vm210 = vcmp.ge.f32.partialorder %v197, %v205
        %v211 = vsel %vm210, 8, 9
        %v212 = vmax.f32 %v202, %v207
        %vm213 = vcmp.ge.f32.partialorder %v202, %v207
        %v214 = vsel %vm213, %v209, %v211
        %v215 = vlaneseq
        %v216 = vshrl.u32 %v215, 7
        %s217 = smul.u32 %s28, 16
        %v218 = vmul.u32 %v216, 2
        %v219 = vstv %s217
        %v220 = vadd.s32 %v219, %v218
        %vm221 = vcmask 519168
        %222 = vst.msk [vmem:[%s187] sm:$0xf] %vm221, %v212
        %v223 = vadd.s32 %v220, %v214
        %224 = vst.msk [vmem:[%s194] sm:$0xf] %vm221, %v223
        %s225 = sand.u32 %s73, 1
        %s226 = scalar_lea.sflag [#allocation4], %s225
        %s227 = sand.u32 %s73, 1
        %s228 = smul.addr %s227, 4
        %s229 = scalar_lea.vmem [#allocation5], %s228
        %s230 = sand.u32 %s101, 1
        %s231 = scalar_lea.sflag [#allocation7], %s230
        %s232 = sand.u32 %s101, 1
        %s233 = smul.addr %s232, 4
        %s234 = scalar_lea.vmem [#allocation6], %s233
        // Predicated region
        $region29: #{tpu_custom_call.1} parent=23 // pred_check
          %p235 = pneg %p83
        $region30: #{tpu_custom_call.1} parent=23 // pred_check_branch
          %237 = sbr.rel (%p235) target = $region32
        $region31: #{tpu_custom_call.1} parent=23 // pred_region
          %239 = vsyncadd %s226, 0
          %s240 = smul.addr %s27, 4
          %s241 = sadd.s32 %s28, %s240
          %s242 = smul.addr %s241, 4
          %s243 = scalar_lea.hbm %s1, %s242
          %s245 = sshll.u32 %s229, 4
          %s246 = int_to_ptr.vmem [resolvable:$true] %s245
          %s247 = sshll.u32 %s243, 4
          %s248 = int_to_ptr.hbm [resolvable:$true] %s247
          %250 = dma.vmem_to_hbm [thread:$0]  %s246, 64, %s248, %s226
        $region32: #{tpu_custom_call.1} parent=23 // pred_fallthru
          _
        // Predicated region
        $region33: #{tpu_custom_call.1} parent=23 // pred_check
          %p251 = pneg %p111
        $region34: #{tpu_custom_call.1} parent=23 // pred_check_branch
          %253 = sbr.rel (%p251) target = $region36
        $region35: #{tpu_custom_call.1} parent=23 // pred_region
          %255 = vsyncadd %s231, 0
          %s256 = smul.addr %s27, 4
          %s257 = sadd.s32 %s28, %s256
          %s258 = smul.addr %s257, 4
          %s259 = scalar_lea.hbm %s2, %s258
          %s261 = sshll.u32 %s234, 4
          %s262 = int_to_ptr.vmem [resolvable:$true] %s261
          %s263 = sshll.u32 %s259, 4
          %s264 = int_to_ptr.hbm [resolvable:$true] %s263
          %266 = dma.vmem_to_hbm [thread:$0]  %s262, 64, %s264, %s231
        $region36: #{tpu_custom_call.1} parent=23 // pred_fallthru
          _
      $region24: #{tpu_custom_call.1} parent=5 // pred_fallthru
        _
      %p267 = scmp.le.s32.totalorder 2, %s18
      // Predicated region
      $region37: #{tpu_custom_call.1} parent=5 // pred_check
        %p268 = pneg %p267
      $region38: #{tpu_custom_call.1} parent=5 // pred_check_branch
        %270 = sbr.rel (%p268) target = $region40
      $region39: #{tpu_custom_call.1} parent=5 // pred_region
        %s271 = ssub.s32 %s18, 2
        // Predicated region
        $region41: #{tpu_custom_call.1} parent=39 // pred_check
          %p272 = pneg %p89
        $region42: #{tpu_custom_call.1} parent=39 // pred_check_branch
          %274 = sbr.rel (%p272) target = $region44
        $region43: #{tpu_custom_call.1} parent=39 // pred_region
          %s275 = sand.u32 %s74, 1
          %s276 = scalar_lea.sflag [#allocation4], %s275
          %s277 = sand.u32 %s74, 1
          %s278 = smul.addr %s277, 4
          %s279 = scalar_lea.vmem [#allocation5], %s278
          %281 = dma.done %s276, 64
        $region44: #{tpu_custom_call.1} parent=39 // pred_fallthru
          _
        // Predicated region
        $region45: #{tpu_custom_call.1} parent=39 // pred_check
          %p282 = pneg %p117
        $region46: #{tpu_custom_call.1} parent=39 // pred_check_branch
          %284 = sbr.rel (%p282) target = $region48
        $region47: #{tpu_custom_call.1} parent=39 // pred_region
          %s285 = sand.u32 %s102, 1
          %s286 = scalar_lea.sflag [#allocation7], %s285
          %s287 = sand.u32 %s102, 1
          %s288 = smul.addr %s287, 4
          %s289 = scalar_lea.vmem [#allocation6], %s288
          %291 = dma.done %s286, 64
        $region48: #{tpu_custom_call.1} parent=39 // pred_fallthru
          _
      $region40: #{tpu_custom_call.1} parent=5 // pred_fallthru
        _
    $region6: #{tpu_custom_call.1} parent=1 // loop_footer
      %s22 = sadd.s32 1, %s18
    $region7: #{tpu_custom_call.1} parent=1 // loop_footer_branch
      %17 = sbr.rel target = $region3
    $region8: #{tpu_custom_call.1} parent=1 // loop_exit
      _
    %292 = vsyncpa [#allocation3], 1
    %s293 = scalar_lea.sflag [#allocation3], 1
    %294 = vsyncpa %s293, 1
    %295 = vsyncpa [#allocation4], 1
    %s296 = scalar_lea.sflag [#allocation4], 1
    %297 = vsyncpa %s296, 1
    %298 = vsyncpa [#allocation7], 1
    %s299 = scalar_lea.sflag [#allocation7], 1
    %300 = vsyncpa %s299, 1

</llo_original>
